<compile_context>
chip_gen: v7x
topology: tpu7x:2x2x1
jax: 0.10.0
libtpu: 0.0.40
codegen_flags: <defaults>
</compile_context>

<pallas_src>
import functools

import jax
import jax.numpy as jnp
from jax import lax
from jax.experimental import pallas as pl
from jax.experimental.pallas import tpu as pltpu


def _attention_kernel(x_ref, w_ref, b_ref, o_ref, qvr_ref, acc_ref, *,
                      tb, seq, dp, tk):
    """One grid step: `tb` batch elements, full sequence length `seq`."""
    mxu_dtype = qvr_ref.dtype            # bf16 (default) or f32 (exact path)
    num_kt = seq // tk

    # ---- fused projection: (tb*L, Dp) @ (Dp, 3Dp), f32 accumulation ---------
    x2d = x_ref[...].reshape(tb * seq, dp)
    qvr = jnp.dot(x2d, w_ref[...], preferred_element_type=jnp.float32)
    qvr = (qvr + b_ref[...]).astype(mxu_dtype)
    # Park q/v/r in narrow VMEM scratch immediately: the f32 projection value
    # dies here instead of staying live across the whole attention phase.
    qvr_ref[0] = qvr[:, 0 * dp:1 * dp].reshape(tb, seq, dp)   # q
    qvr_ref[1] = qvr[:, 1 * dp:2 * dp].reshape(tb, seq, dp)   # v
    qvr_ref[2] = qvr[:, 2 * dp:3 * dp].reshape(tb, seq, dp)   # r

    def batch_body(bb, carry):
        q_b = qvr_ref[0, bb, :, :]                             # (L, Dp)
        acc_ref[...] = jnp.zeros_like(acc_ref)

        def kt_body(j, kcarry):
            k0 = pl.multiple_of(j * tk, tk)
            v_j = qvr_ref[1, bb, pl.ds(k0, tk), :]             # (TK, Dp)
            r_j = qvr_ref[2, bb, pl.ds(k0, tk), :]             # (TK, Dp)
            # scores[:, tile] = q_b @ v_j^T (contract last dims; no transpose).
            s = lax.dot_general(q_b, v_j, (((1,), (1,)), ((), ())),
                                preferred_element_type=jnp.float32)  # (L, TK)
            # torch Softmax(dim=1) on (B, Lq, Lk) == normalize over the QUERY
            # axis (axis 0 here) -- a faithful reproduction of the module, not
            # standard attention; do NOT "fix" the axis.  Every key column is
            # fully resident in this tile, so per-tile max/sum is exact.
            m = jnp.max(s, axis=0, keepdims=True)              # (1, TK)
            e = jnp.exp(s - m)                                 # (L, TK) f32
            inv = pl.reciprocal(jnp.sum(e, axis=0, keepdims=True))  # exact
            if seq > dp:
                # Fold 1/denom into r_j: TK*Dp multiplies instead of L*TK
                # (cheaper whenever L > Dp; biggest win on v5e's VPU).
                r_s = (r_j.astype(jnp.float32) * inv.reshape(tk, 1)).astype(mxu_dtype)
                acc_ref[...] += jnp.dot(e.astype(mxu_dtype), r_s,
                                        preferred_element_type=jnp.float32)
            else:
                attn = (e * inv).astype(mxu_dtype)
                acc_ref[...] += jnp.dot(attn, r_j,
                                        preferred_element_type=jnp.float32)
            return kcarry

        lax.fori_loop(0, num_kt, kt_body, 0, unroll=min(2, num_kt))
        o_ref[bb] = acc_ref[...].astype(o_ref.dtype)           # lane-dense store
        return carry

    lax.fori_loop(0, tb, batch_body, 0)


def _tpu_defaults():
    """(vmem_capacity_bytes, is_v5) with safe fallbacks."""
    vmem_cap = 128 * 1024 * 1024
    is_v5 = False
    try:
        vmem_cap = int(getattr(pltpu.get_tpu_info(), "vmem_capacity_bytes", vmem_cap))
    except Exception:
        pass
    try:
        is_v5 = "v5" in jax.devices()[0].device_kind.lower()
    except Exception:
        pass
    return vmem_cap, is_v5


def attention_forward(x, wq, bq, wv, bv, wr, br, *,
                      batch_tile=None, key_tile=None, mxu_bf16=True):
    """x: (B, L, D). Weights are torch-layout (out, in) = (D, D); biases (1, D)."""
    B, L, D = x.shape
    out_dtype = x.dtype

    # ---- wrapper-side layout plumbing (one-time XLA ops) ---------------------
    # Pad the embedding dim to a 128-lane multiple; zero padding is exact
    # (padded q/v columns contribute 0 to scores, padded r columns are stripped).
    dp = ((D + 127) // 128) * 128
    pad = dp - D

    # bf16 MXU path (default): cast activations/weights once here.  Accumulation
    # stays f32 in-kernel; set mxu_bf16=False for the exact f32 path.
    mxu_dtype = jnp.bfloat16 if (mxu_bf16 or x.dtype == jnp.bfloat16) else jnp.float32

    xp = jnp.pad(x, ((0, 0), (0, 0), (0, pad))) if pad else x
    xp = xp.astype(mxu_dtype)

    def prep_w(w):   # torch (out, in) -> pre-transposed, padded (in, out)
        return jnp.pad(w.T, ((0, pad), (0, pad))).astype(mxu_dtype)

    def prep_b(b):   # (1, D) -> (1, Dp); bias stays f32 (added after the matmul)
        return jnp.pad(b, ((0, 0), (0, pad))).astype(jnp.float32)

    # Column order q | v | r must match the kernel's slicing.
    w_qvr = jnp.concatenate([prep_w(wq), prep_w(wv), prep_w(wr)], axis=1)  # (Dp, 3Dp)
    b_qvr = jnp.concatenate([prep_b(bq), prep_b(bv), prep_b(br)], axis=1)  # (1, 3Dp)

    # ---- per-generation tile / VMEM budgeting --------------------------------
    vmem_cap, is_v5 = _tpu_defaults()
    # ~85% of physical VMEM: ~108 MiB on v5e/v6e (128 MiB), ~54 MiB on v7x (64 MiB).
    vmem_limit = int(vmem_cap * 0.85)

    if key_tile is None:
        # v5e MXU is 4x(128x128): TK=256 already fills a pass and keeps the f32
        # (L, TK) score/exp temporaries small; larger tiles are fine on v6e/v7x.
        key_tile = 256 if is_v5 else 512
    tk = max(1, min(key_tile, L))
    while L % tk:
        tk -= 1

    xb = jnp.dtype(mxu_dtype).itemsize
    ob = jnp.dtype(out_dtype).itemsize
    # Resident bytes: single-buffered weight + bias + f32 accumulator + f32
    # score/exp temporaries + slack.
    fixed = dp * 3 * dp * xb + 3 * dp * 4 + L * dp * 4 + 3 * L * tk * 4 + (4 << 20)
    # Per batch element: double-buffered x / out blocks, q/v/r scratch, and the
    # transient f32 projection result.
    per_b = L * dp * (2 * xb + 2 * ob + 3 * xb) + L * 3 * dp * 4

    # Cap tb at B//2 so the "parallel" batch axis has >= 2 grid steps (both v7x
    # TensorCores get work; the pipeline always has something to overlap), then
    # pick the largest divisor of B that fits the VMEM budget.
    cap = max(1, B // 2) if B > 1 else 1
    if batch_tile is not None:
        cap = min(cap, max(1, batch_tile))
    tb = 1
    for cand in range(1, cap + 1):
        if B % cand == 0 and fixed + cand * per_b <= vmem_limit:
            tb = cand

    kernel = functools.partial(_attention_kernel, tb=tb, seq=L, dp=dp, tk=tk)

    cost = pl.CostEstimate(
        flops=int(2 * B * L * dp * (3 * dp) + 4 * B * L * L * dp),
        transcendentals=int(B * L * L),
        bytes_accessed=int(xp.size * xb + w_qvr.size * xb + b_qvr.size * 4
                           + B * L * dp * ob),
    )

    const_mode = pl.Buffered(1)   # constant blocks: drop the second pipeline buffer

    out_padded = pl.pallas_call(
        kernel,
        out_shape=jax.ShapeDtypeStruct((B, L, dp), out_dtype),
        grid_spec=pltpu.PrefetchScalarGridSpec(
            num_scalar_prefetch=0,
            grid=(B // tb,),
            in_specs=[
                pl.BlockSpec((tb, L, dp), lambda i: (i, 0, 0)),          # x
                pl.BlockSpec((dp, 3 * dp), lambda i: (0, 0),
                             pipeline_mode=const_mode),                  # fused W
                pl.BlockSpec((1, 3 * dp), lambda i: (0, 0),
                             pipeline_mode=const_mode),                  # fused bias
            ],
            out_specs=pl.BlockSpec((tb, L, dp), lambda i: (i, 0, 0)),
            scratch_shapes=[
                pltpu.VMEM((3, tb, L, dp), mxu_dtype),   # q/v/r (narrow dtype)
                pltpu.VMEM((L, dp), jnp.float32),        # per-batch accumulator
            ],
        ),
        compiler_params=pltpu.CompilerParams(
            dimension_semantics=("parallel",),
            vmem_limit_bytes=vmem_limit,
        ),
        cost_estimate=cost,
    )(xp, w_qvr, b_qvr)

    return out_padded[:, :, :D] if pad else out_padded


def attention_reference(x, wq, bq, wv, bv, wr, br):
    """Pure-JAX reference matching the PyTorch module semantics (high precision)."""
    hp = lax.Precision.HIGHEST
    v = jnp.einsum("bld,ed->ble", x, wv, precision=hp) + bv[0]
    q = jnp.einsum("bld,ed->ble", x, wq, precision=hp) + bq[0]
    r = jnp.einsum("bld,ed->ble", x, wr, precision=hp) + br[0]
    scores = jnp.einsum("bqd,bkd->bqk", q, v, precision=hp)     # bmm(q, v^T)
    attn = jax.nn.softmax(scores, axis=1)                       # Softmax(dim=1)
    return jnp.einsum("bqk,bkd->bqd", attn, r, precision=hp)    # bmm(attn, r)


def _make_inputs(key, B, L, D):
    kx, kq, kbq, kv, kbv, kr, kbr = jax.random.split(key, 7)
    x = jax.random.normal(kx, (B, L, D), dtype=jnp.float32)
    bound = 1.0 / (D ** 0.5)           # torch.nn.Linear-like uniform init scale
    u = lambda k, s: jax.random.uniform(k, s, jnp.float32, -bound, bound)
    return (x, u(kq, (D, D)), u(kbq, (1, D)), u(kv, (D, D)), u(kbv, (1, D)),
            u(kr, (D, D)), u(kbr, (1, D)))


if __name__ == "__main__":
    key = jax.random.PRNGKey(0)
    k1, k2 = jax.random.split(key)

    # Case 1: module-default small shape (batch, len_sequence, dim_embedding).
    B, L, D = 2, 8, 32
    args = _make_inputs(k1, B, L, D)
    ref = attention_reference(*args)

    out_bf16 = jax.block_until_ready(attention_forward(*args))  # default bf16 MXU path
    assert out_bf16.shape == (B, L, D)
    assert jnp.allclose(out_bf16, ref, atol=5e-2, rtol=5e-2), "bf16-MXU path mismatch"

    out_f32 = jax.block_until_ready(attention_forward(*args, mxu_bf16=False))
    assert jnp.allclose(out_f32, ref, atol=5e-3, rtol=5e-3), "f32 path mismatch"

    # Case 2: L > padded D and more than one key tile: exercises the r-side
    # softmax normalization branch and the accumulating key-tile fori_loop.
    B2, L2, D2 = 2, 256, 32
    args2 = _make_inputs(k2, B2, L2, D2)
    ref2 = attention_reference(*args2)
    out2 = jax.block_until_ready(attention_forward(*args2, key_tile=128))
    assert out2.shape == (B2, L2, D2)
    assert jnp.allclose(out2, ref2, atol=5e-2, rtol=5e-2), "key-tiled path mismatch"

    print("KERNEL_OK")
</pallas_src>

<mosaic_0001>
module attributes {stable_mosaic.version = 11 : i64} {
  func.func @_attention_kernel(%arg0: i32, %arg1: memref<1x8x128xbf16, #tpu.memory_space<vmem>>, %arg2: memref<128x384xbf16, #tpu.memory_space<vmem>>, %arg3: memref<1x384xf32, #tpu.memory_space<vmem>>, %arg4: memref<1x8x128xf32, #tpu.memory_space<vmem>>, %arg5: memref<3x1x8x128xbf16, #tpu.memory_space<vmem>>, %arg6: memref<8x128xf32, #tpu.memory_space<vmem>>) attributes {dimension_semantics = [#tpu.dimension_semantics<parallel>], iteration_bounds = array<i64: 2>, scalar_prefetch = 0 : i64, scratch_operands = 2 : i64, tpu.core_type = #tpu.core_type<tc>, window_params = [{transform_indices = @transform_0, window_bounds = array<i64: 1, 8, 128>}, {pipeline_mode = #tpu.pipeline_mode<synchronous>, transform_indices = @transform_1, window_bounds = array<i64: 128, 384>}, {pipeline_mode = #tpu.pipeline_mode<synchronous>, transform_indices = @transform_2, window_bounds = array<i64: 1, 384>}, {transform_indices = @transform_3, window_bounds = array<i64: 1, 8, 128>}]} {
    %c0 = arith.constant 0 : index
    %c0_0 = arith.constant 0 : index
    %c0_1 = arith.constant 0 : index
    %0 = vector.load %arg1[%c0, %c0_0, %c0_1] : memref<1x8x128xbf16, #tpu.memory_space<vmem>>, vector<1x8x128xbf16>
    %1 = vector.shape_cast %0 : vector<1x8x128xbf16> to vector<8x128xbf16>
    %c0_2 = arith.constant 0 : index
    %c0_3 = arith.constant 0 : index
    %2 = vector.load %arg2[%c0_2, %c0_3] : memref<128x384xbf16, #tpu.memory_space<vmem>>, vector<128x384xbf16>
    %cst = arith.constant dense<0.000000e+00> : vector<8x384xf32>
    %3 = tpu.matmul %1, %2, %cst {dimension_numbers = #tpu.dot_dimension_numbers<[1], [0], [0], [1], [0, 0, 1, 1], [], []>} : vector<8x128xbf16>, vector<128x384xbf16>, vector<8x384xf32> -> vector<8x384xf32>
    %c0_4 = arith.constant 0 : index
    %c0_5 = arith.constant 0 : index
    %4 = vector.load %arg3[%c0_4, %c0_5] : memref<1x384xf32, #tpu.memory_space<vmem>>, vector<1x384xf32>
    %5 = vector.broadcast %4 : vector<1x384xf32> to vector<8x384xf32>
    %6 = arith.addf %3, %5 : vector<8x384xf32>
    %7 = arith.truncf %6 : vector<8x384xf32> to vector<8x384xbf16>
    %8 = vector.extract_strided_slice %7 {offsets = [0, 0], sizes = [8, 128], strides = [1, 1]} : vector<8x384xbf16> to vector<8x128xbf16>
    %9 = vector.shape_cast %8 : vector<8x128xbf16> to vector<1x8x128xbf16>
    %c0_6 = arith.constant 0 : index
    %c0_7 = arith.constant 0 : index
    %c0_8 = arith.constant 0 : index
    %c0_9 = arith.constant 0 : index
    %10 = vector.load %arg5[%c0_6, %c0_7, %c0_8, %c0_9] : memref<3x1x8x128xbf16, #tpu.memory_space<vmem>>, vector<1x1x8x128xbf16>
    %11 = vector.shape_cast %10 : vector<1x1x8x128xbf16> to vector<1x8x128xbf16>
    %12 = vector.shape_cast %9 : vector<1x8x128xbf16> to vector<1x1x8x128xbf16>
    tpu.vector_store %arg5[%c0_6, %c0_7, %c0_8, %c0_9], %12 {strides = array<i32>} : memref<3x1x8x128xbf16, #tpu.memory_space<vmem>>, vector<1x1x8x128xbf16>,
    %13 = vector.extract_strided_slice %7 {offsets = [0, 128], sizes = [8, 128], strides = [1, 1]} : vector<8x384xbf16> to vector<8x128xbf16>
    %14 = vector.shape_cast %13 : vector<8x128xbf16> to vector<1x8x128xbf16>
    %c1 = arith.constant 1 : index
    %c0_10 = arith.constant 0 : index
    %c0_11 = arith.constant 0 : index
    %c0_12 = arith.constant 0 : index
    %15 = vector.load %arg5[%c1, %c0_10, %c0_11, %c0_12] : memref<3x1x8x128xbf16, #tpu.memory_space<vmem>>, vector<1x1x8x128xbf16>
    %16 = vector.shape_cast %15 : vector<1x1x8x128xbf16> to vector<1x8x128xbf16>
    %17 = vector.shape_cast %14 : vector<1x8x128xbf16> to vector<1x1x8x128xbf16>
    tpu.vector_store %arg5[%c1, %c0_10, %c0_11, %c0_12], %17 {strides = array<i32>} : memref<3x1x8x128xbf16, #tpu.memory_space<vmem>>, vector<1x1x8x128xbf16>,
    %18 = vector.extract_strided_slice %7 {offsets = [0, 256], sizes = [8, 128], strides = [1, 1]} : vector<8x384xbf16> to vector<8x128xbf16>
    %19 = vector.shape_cast %18 : vector<8x128xbf16> to vector<1x8x128xbf16>
    %c2 = arith.constant 2 : index
    %c0_13 = arith.constant 0 : index
    %c0_14 = arith.constant 0 : index
    %c0_15 = arith.constant 0 : index
    %20 = vector.load %arg5[%c2, %c0_13, %c0_14, %c0_15] : memref<3x1x8x128xbf16, #tpu.memory_space<vmem>>, vector<1x1x8x128xbf16>
    %21 = vector.shape_cast %20 : vector<1x1x8x128xbf16> to vector<1x8x128xbf16>
    %22 = vector.shape_cast %19 : vector<1x8x128xbf16> to vector<1x1x8x128xbf16>
    tpu.vector_store %arg5[%c2, %c0_13, %c0_14, %c0_15], %22 {strides = array<i32>} : memref<3x1x8x128xbf16, #tpu.memory_space<vmem>>, vector<1x1x8x128xbf16>,
    %c0_i32 = arith.constant 0 : i32
    %c0_16 = arith.constant 0 : index
    %23 = arith.index_cast %c0_i32 : i32 to index
    %c0_17 = arith.constant 0 : index
    %c0_18 = arith.constant 0 : index
    %24 = vector.load %arg5[%c0_16, %23, %c0_17, %c0_18] : memref<3x1x8x128xbf16, #tpu.memory_space<vmem>>, vector<1x1x8x128xbf16>
    %25 = vector.shape_cast %24 : vector<1x1x8x128xbf16> to vector<8x128xbf16>
    %cst_19 = arith.constant 0.000000e+00 : f32
    %26 = vector.broadcast %cst_19 : f32 to vector<8x128xf32>
    %c0_20 = arith.constant 0 : index
    %c0_21 = arith.constant 0 : index
    %27 = vector.load %arg6[%c0_20, %c0_21] : memref<8x128xf32, #tpu.memory_space<vmem>>, vector<8x128xf32>
    tpu.vector_store %arg6[%c0_20, %c0_21], %26 {strides = array<i32>} : memref<8x128xf32, #tpu.memory_space<vmem>>, vector<8x128xf32>,
    %c0_i32_22 = arith.constant 0 : i32
    %c8_i32 = arith.constant 8 : i32
    %28 = arith.muli %c0_i32_22, %c8_i32 : i32
    %29 = tpu.assume_multiple %28, 8 : i32
    %c1_23 = arith.constant 1 : index
    %30 = arith.index_cast %c0_i32 : i32 to index
    %31 = arith.index_cast %29 : i32 to index
    %c0_24 = arith.constant 0 : index
    %32 = vector.load %arg5[%c1_23, %30, %31, %c0_24] : memref<3x1x8x128xbf16, #tpu.memory_space<vmem>>, vector<1x1x8x128xbf16>
    %33 = vector.shape_cast %32 : vector<1x1x8x128xbf16> to vector<8x128xbf16>
    %c2_25 = arith.constant 2 : index
    %34 = arith.index_cast %c0_i32 : i32 to index
    %35 = arith.index_cast %29 : i32 to index
    %c0_26 = arith.constant 0 : index
    %36 = vector.load %arg5[%c2_25, %34, %35, %c0_26] : memref<3x1x8x128xbf16, #tpu.memory_space<vmem>>, vector<1x1x8x128xbf16>
    %37 = vector.shape_cast %36 : vector<1x1x8x128xbf16> to vector<8x128xbf16>
    %cst_27 = arith.constant dense<0.000000e+00> : vector<8x8xf32>
    %38 = tpu.matmul %25, %33, %cst_27 {dimension_numbers = #tpu.dot_dimension_numbers<[1], [1], [0], [0], [0, 0, 1, 0], [], []>} : vector<8x128xbf16>, vector<8x128xbf16>, vector<8x8xf32> -> vector<8x8xf32>
    %cst_28 = arith.constant dense<0xFF800000> : vector<8xf32>
    %39 = vector.multi_reduction <maximumf>, %38, %cst_28 [0] : vector<8x8xf32> to vector<8xf32>
    %40 = vector.shape_cast %39 : vector<8xf32> to vector<1x8xf32>
    %41 = vector.broadcast %40 : vector<1x8xf32> to vector<8x8xf32>
    %42 = arith.subf %38, %41 : vector<8x8xf32>
    %43 = math.exp %42 : vector<8x8xf32>
    %cst_29 = arith.constant dense<0.000000e+00> : vector<8xf32>
    %44 = vector.multi_reduction <add>, %43, %cst_29 [0] : vector<8x8xf32> to vector<8xf32>
    %45 = vector.shape_cast %44 : vector<8xf32> to vector<1x8xf32>
    %46 = tpu.reciprocal %45 : vector<1x8xf32> -> vector<1x8xf32>
    %47 = vector.broadcast %46 : vector<1x8xf32> to vector<8x8xf32>
    %48 = arith.mulf %43, %47 : vector<8x8xf32>
    %49 = arith.truncf %48 : vector<8x8xf32> to vector<8x8xbf16>
    %c0_30 = arith.constant 0 : index
    %c0_31 = arith.constant 0 : index
    %50 = vector.load %arg6[%c0_30, %c0_31] : memref<8x128xf32, #tpu.memory_space<vmem>>, vector<8x128xf32>
    %cst_32 = arith.constant dense<0.000000e+00> : vector<8x128xf32>
    %51 = tpu.matmul %49, %37, %cst_32 {dimension_numbers = #tpu.dot_dimension_numbers<[1], [0], [0], [1], [0, 0, 1, 1], [], []>} : vector<8x8xbf16>, vector<8x128xbf16>, vector<8x128xf32> -> vector<8x128xf32>
    %52 = arith.addf %50, %51 : vector<8x128xf32>
    %c0_33 = arith.constant 0 : index
    %c0_34 = arith.constant 0 : index
    %53 = vector.load %arg6[%c0_33, %c0_34] : memref<8x128xf32, #tpu.memory_space<vmem>>, vector<8x128xf32>
    tpu.vector_store %arg6[%c0_33, %c0_34], %52 {strides = array<i32>} : memref<8x128xf32, #tpu.memory_space<vmem>>, vector<8x128xf32>,
    %c1_i32 = arith.constant 1 : i32
    %c0_35 = arith.constant 0 : index
    %c0_36 = arith.constant 0 : index
    %54 = vector.load %arg6[%c0_35, %c0_36] : memref<8x128xf32, #tpu.memory_space<vmem>>, vector<8x128xf32>
    %55 = arith.index_cast %c0_i32 : i32 to index
    %c0_37 = arith.constant 0 : index
    %c0_38 = arith.constant 0 : index
    %56 = vector.load %arg4[%55, %c0_37, %c0_38] : memref<1x8x128xf32, #tpu.memory_space<vmem>>, vector<1x8x128xf32>
    %57 = vector.shape_cast %56 : vector<1x8x128xf32> to vector<8x128xf32>
    %58 = vector.shape_cast %54 : vector<8x128xf32> to vector<1x8x128xf32>
    tpu.vector_store %arg4[%55, %c0_37, %c0_38], %58 {strides = array<i32>} : memref<1x8x128xf32, #tpu.memory_space<vmem>>, vector<1x8x128xf32>,
    %c1_i32_39 = arith.constant 1 : i32
    return
  }
  func.func @transform_0(%arg0: i32) -> (i32, i32, i32) {
    %c0_i32 = arith.constant 0 : i32
    %c0_i32_0 = arith.constant 0 : i32
    %c0_i32_1 = arith.constant 0 : i32
    return %arg0, %c0_i32, %c0_i32_0 : i32, i32, i32
  }
  func.func @transform_1(%arg0: i32) -> (i32, i32) {
    %c0_i32 = arith.constant 0 : i32
    %c0_i32_0 = arith.constant 0 : i32
    %c0_i32_1 = arith.constant 0 : i32
    return %c0_i32, %c0_i32_0 : i32, i32
  }
  func.func @transform_2(%arg0: i32) -> (i32, i32) {
    %c0_i32 = arith.constant 0 : i32
    %c0_i32_0 = arith.constant 0 : i32
    %c0_i32_1 = arith.constant 0 : i32
    return %c0_i32, %c0_i32_0 : i32, i32
  }
  func.func @transform_3(%arg0: i32) -> (i32, i32, i32) {
    %c0_i32 = arith.constant 0 : i32
    %c0_i32_0 = arith.constant 0 : i32
    %c0_i32_1 = arith.constant 0 : i32
    return %arg0, %c0_i32, %c0_i32_0 : i32, i32, i32
  }
}

</mosaic_0001>

<llo_original>
// kernel: tpu_custom_call.1
$region0: #{tpu_custom_call.1}
  #allocation0 [shape = 'u32[]', space=smem, size = 0x4, offset = 0x4, fixed_abs, tag = 'smem constant byte address 0x4 - core index']
  #allocation1 [shape = 'u32[144,128]{1,0:T(1,128)}', space=vmem, size = 0x12000, scoped, tag = 'internal scratch']
  #allocation2 [shape = 'bf16[3,1,8,128]{3,2,1,0:T(8,128)(2,1)}', space=vmem, size = 0x1800, scoped, tag = 'scratch operand']
  #allocation3 [shape = 'f32[8,128]{1,0:T(8,128)}', space=vmem, size = 0x1000, scoped, tag = 'scratch operand']
  %s0 = inlined_call_operand.hbm [shape: bf16[2,8,128], index: 0, kind: input, shape index: {}]
  %s1 = inlined_call_operand.hbm [shape: bf16[128,384], index: 1, kind: input, shape index: {}]
  %s2 = inlined_call_operand.hbm [shape: f32[1,384], index: 2, kind: input, shape index: {}]
  %s3 = inlined_call_operand.hbm [shape: f32[2,8,128], index: 3, kind: output, shape index: {}]
  %s4 = sld [smem:[#allocation0]]
  $region57: #{tpu_custom_call.1} parent=0
    _
  %s6 = ssub.s32 1, %s4
  %s7 = scalar_select 0, %s6, %s4
  $region1: #{tpu_custom_call.1} parent=0
    #allocation4 [shape = 'u8[4096]{0}', space=vmem, size = 0x1000, scoped, tag = 'input window, operand 0']
    #allocation5 [shape = 's32[2]{0}', space=sflag, size = 0x8, scoped, tag = 'scoped memory for tpu_custom_call.1']
    #allocation6 [shape = 's32[2]{0}', space=sflag, size = 0x8, scoped, tag = 'scoped memory for tpu_custom_call.1']
    #allocation7 [shape = 'u8[98304]{0}', space=vmem, size = 0x18000, scoped, tag = 'input window, operand 1, single buffered']
    #allocation8 [shape = 's32[1]{0}', space=sflag, size = 0x4, scoped, tag = 'scoped memory for tpu_custom_call.1']
    #allocation9 [shape = 'u8[1536]{0}', space=vmem, size = 0x800, scoped, tag = 'input window, operand 2, single buffered']
    #allocation10 [shape = 'u8[8192]{0}', space=vmem, size = 0x2000, scoped, tag = 'output window, operand 0']
    %8 = vsyncpa [#allocation5], 0
    %s9 = scalar_lea.sflag [#allocation5], 1
    %10 = vsyncpa %s9, 0
    %11 = vsyncpa [#allocation8], 0
    %12 = vsyncpa [#allocation6], 0
    %s13 = scalar_lea.sflag [#allocation6], 1
    %14 = vsyncpa %s13, 0
    loop: start=0, step=1, limit=4
    $region2: #{tpu_custom_call.1} parent=1 // loop_pre_header
      _
    $region3: #{tpu_custom_call.1} parent=1 // loop_header
      %s16 = sphi 0, %s20
      %p17 = scmp.ge.s32.totalorder %s16, 4
      %s26 = sphi 0, %s28
      %s29 = sphi 0, %s26
      %s30 = sphi 0, %s29
      %s46 = sphi 0, %s30
      %s50 = sphi 0, %s50
      %s52 = sphi 0, %s50
      %s53 = sphi 0, %s52
      %s67 = sphi 0, %s53
      %s71 = sphi 0, %s71
      %s73 = sphi 0, %s71
      %s74 = sphi 0, %s73
      %s88 = sphi 0, %s74
      %s94 = sphi 0, %s96
      %s97 = sphi 0, %s94
      %s98 = sphi 0, %s97
      %s114 = sphi 0, %s98
    $region4: #{tpu_custom_call.1} parent=1 // loop_header_branch
      %19 = sbr.rel (%p17) target = $region8
    $region5: #{tpu_custom_call.1} parent=1 // loop_body
      %s21 = ssub.s32 %s16, 1
      %s22 = ssub.s32 %s16, 2
      %s23 = sadd.s32 %s16, 1
      %s24 = ssub.s32 %s16, %s23
      %p25 = scmp.eq.s32.totalorder %s24, 0
      %s27 = sadd.s32 %s26, 1
      %s28 = scalar_select %p25, %s26, %s27
      %p31 = pneg %p25
      %p32 = scmp.eq.s32.totalorder %s16, 1
      %p33 = por %p31, %p32
      %p34 = scmp.ne.s32.totalorder %s26, %s29
      %p35 = scmp.eq.s32.totalorder %s16, 0
      %p36 = por %p34, %p35
      %p37 = scmp.ne.s32.totalorder %s26, %s29
      %p38 = scmp.eq.s32.totalorder %s21, 1
      %p39 = por %p37, %p38
      %p40 = scmp.ne.s32.totalorder %s29, %s30
      %p41 = scmp.eq.s32.totalorder %s21, 0
      %p42 = por %p40, %p41
      %p43 = scmp.ne.s32.totalorder %s29, %s30
      %p44 = scmp.eq.s32.totalorder %s22, 1
      %p45 = por %p43, %p44
      %p47 = scmp.ne.s32.totalorder %s30, %s46
      %p48 = scmp.eq.s32.totalorder %s22, 0
      %p49 = por %p47, %p48
      %s51 = sadd.s32 %s50, 1
      %p54 = scmp.eq.s32.totalorder %s16, 1
      %p55 = scmp.ne.s32.totalorder %s50, %s52
      %p56 = scmp.eq.s32.totalorder %s16, 0
      %p57 = por %p55, %p56
      %p58 = scmp.ne.s32.totalorder %s50, %s52
      %p59 = scmp.eq.s32.totalorder %s21, 1
      %p60 = por %p58, %p59
      %p61 = scmp.ne.s32.totalorder %s52, %s53
      %p62 = scmp.eq.s32.totalorder %s21, 0
      %p63 = por %p61, %p62
      %p64 = scmp.ne.s32.totalorder %s52, %s53
      %p65 = scmp.eq.s32.totalorder %s22, 1
      %p66 = por %p64, %p65
      %p68 = scmp.ne.s32.totalorder %s53, %s67
      %p69 = scmp.eq.s32.totalorder %s22, 0
      %p70 = por %p68, %p69
      %s72 = sadd.s32 %s71, 1
      %p75 = scmp.eq.s32.totalorder %s16, 1
      %p76 = scmp.ne.s32.totalorder %s71, %s73
      %p77 = scmp.eq.s32.totalorder %s16, 0
      %p78 = por %p76, %p77
      %p79 = scmp.ne.s32.totalorder %s71, %s73
      %p80 = scmp.eq.s32.totalorder %s21, 1
      %p81 = por %p79, %p80
      %p82 = scmp.ne.s32.totalorder %s73, %s74
      %p83 = scmp.eq.s32.totalorder %s21, 0
      %p84 = por %p82, %p83
      %p85 = scmp.ne.s32.totalorder %s73, %s74
      %p86 = scmp.eq.s32.totalorder %s22, 1
      %p87 = por %p85, %p86
      %p89 = scmp.ne.s32.totalorder %s74, %s88
      %p90 = scmp.eq.s32.totalorder %s22, 0
      %p91 = por %p89, %p90
      %s92 = ssub.s32 %s16, %s23
      %p93 = scmp.eq.s32.totalorder %s92, 0
      %s95 = sadd.s32 %s94, 1
      %s96 = scalar_select %p93, %s94, %s95
      %p99 = pneg %p93
      %p100 = scmp.eq.s32.totalorder %s16, 1
      %p101 = por %p99, %p100
      %p102 = scmp.ne.s32.totalorder %s94, %s97
      %p103 = scmp.eq.s32.totalorder %s16, 0
      %p104 = por %p102, %p103
      %p105 = scmp.ne.s32.totalorder %s94, %s97
      %p106 = scmp.eq.s32.totalorder %s21, 1
      %p107 = por %p105, %p106
      %p108 = scmp.ne.s32.totalorder %s97, %s98
      %p109 = scmp.eq.s32.totalorder %s21, 0
      %p110 = por %p108, %p109
      %p111 = scmp.ne.s32.totalorder %s97, %s98
      %p112 = scmp.eq.s32.totalorder %s22, 1
      %p113 = por %p111, %p112
      %p115 = scmp.ne.s32.totalorder %s98, %s114
      %p116 = scmp.eq.s32.totalorder %s22, 0
      %p117 = por %p115, %p116
      %p118 = scmp.le.s32.totalorder 1, %s16
      %p119 = scmp.lt.s32.totalorder %s16, 3
      %p120 = pnand %p118, %p119
      %p121 = pneg %p120
      // Predicated region
      $region9: #{tpu_custom_call.1} parent=5 // pred_check
        _
      $region10: #{tpu_custom_call.1} parent=5 // pred_check_branch
        %123 = sbr.rel (%p120) target = $region12
      $region11: #{tpu_custom_call.1} parent=5 // pred_region
        %s124 = ssub.s32 %s16, 1
        // Predicated region
        $region13: #{tpu_custom_call.1} parent=11 // pred_check
          %p125 = pneg %p63
        $region14: #{tpu_custom_call.1} parent=11 // pred_check_branch
          %127 = sbr.rel (%p125) target = $region16
        $region15: #{tpu_custom_call.1} parent=11 // pred_region
          %s129 = ssub.s32 3072, 3072
          %130 = vsyncadd [#allocation8], %s129
          %s131 = sshll.u32 [#allocation7], 4
          %s132 = int_to_ptr.vmem [resolvable:$true] %s131
          %137 = dma.hbm_to_vmem [thread:$0]  %s1, 3072, %s132, [#allocation8], 192, 192, 12
        $region16: #{tpu_custom_call.1} parent=11 // pred_fallthru
          _
        // Predicated region
        $region17: #{tpu_custom_call.1} parent=11 // pred_check
          %p138 = pneg %p84
        $region18: #{tpu_custom_call.1} parent=11 // pred_check_branch
          %140 = sbr.rel (%p138) target = $region20
        $region19: #{tpu_custom_call.1} parent=11 // pred_region
          %s142 = ssub.s32 48, 48
          %143 = vsyncadd [#allocation8], %s142
          %s145 = sshll.u32 [#allocation9], 4
          %s146 = int_to_ptr.vmem [resolvable:$true] %s145
          %148 = dma.hbm_to_vmem [thread:$0]  %s2, 48, %s146, [#allocation8]
        $region20: #{tpu_custom_call.1} parent=11 // pred_fallthru
          _
      $region12: #{tpu_custom_call.1} parent=5 // pred_fallthru
        _
      %p149 = scmp.lt.s32.totalorder %s16, 2
      // Predicated region
      $region21: #{tpu_custom_call.1} parent=5 // pred_check
        %p150 = pneg %p149
      $region22: #{tpu_custom_call.1} parent=5 // pred_check_branch
        %152 = sbr.rel (%p150) target = $region24
      $region23: #{tpu_custom_call.1} parent=5 // pred_region
        // Predicated region
        $region25: #{tpu_custom_call.1} parent=23 // pred_check
          %p153 = pneg %p36
        $region26: #{tpu_custom_call.1} parent=23 // pred_check_branch
          %155 = sbr.rel (%p153) target = $region28
        $region27: #{tpu_custom_call.1} parent=23 // pred_region
          %s156 = sand.u32 %s26, 1
          %s157 = scalar_lea.sflag [#allocation5], %s156
          %s158 = sand.u32 %s26, 1
          %s159 = smul.addr %s158, 4
          %s160 = scalar_lea.vmem [#allocation4], %s159
          %s162 = ssub.s32 64, 64
          %163 = vsyncadd %s157, %s162
          %s164 = smul.addr %s16, 64
          %s165 = scalar_lea.hbm %s0, %s164
          %s167 = sshll.u32 %s160, 4
          %s168 = int_to_ptr.vmem [resolvable:$true] %s167
          %170 = dma.hbm_to_vmem [thread:$0]  %s165, 64, %s168, %s157
        $region28: #{tpu_custom_call.1} parent=23 // pred_fallthru
          _
      $region24: #{tpu_custom_call.1} parent=5 // pred_fallthru
        _
      %p171 = scmp.le.s32.totalorder 1, %s16
      %p172 = scmp.lt.s32.totalorder %s16, 3
      %p173 = pnand %p171, %p172
      %p174 = pneg %p173
      // Predicated region
      $region29: #{tpu_custom_call.1} parent=5 // pred_check
        _
      $region30: #{tpu_custom_call.1} parent=5 // pred_check_branch
        %176 = sbr.rel (%p173) target = $region32
      $region31: #{tpu_custom_call.1} parent=5 // pred_region
        %s177 = ssub.s32 %s16, 1
        %s178 = sand.u32 %s29, 1
        %s179 = scalar_lea.sflag [#allocation5], %s178
        %s180 = sand.u32 %s29, 1
        %s181 = smul.addr %s180, 4
        %s182 = scalar_lea.vmem [#allocation4], %s181
        // Predicated region
        $region33: #{tpu_custom_call.1} parent=31 // pred_check
          %p183 = pneg %p42
        $region34: #{tpu_custom_call.1} parent=31 // pred_check_branch
          %185 = sbr.rel (%p183) target = $region36
        $region35: #{tpu_custom_call.1} parent=31 // pred_region
          %186 = dma.done %s179, 64
        $region36: #{tpu_custom_call.1} parent=31 // pred_fallthru
          _
        // Predicated region
        $region37: #{tpu_custom_call.1} parent=31 // pred_check
          %p187 = pneg %p63
        $region38: #{tpu_custom_call.1} parent=31 // pred_check_branch
          %189 = sbr.rel (%p187) target = $region40
        $region39: #{tpu_custom_call.1} parent=31 // pred_region
          %190 = dma.done [#allocation8], 3072
        $region40: #{tpu_custom_call.1} parent=31 // pred_fallthru
          _
        // Predicated region
        $region41: #{tpu_custom_call.1} parent=31 // pred_check
          %p191 = pneg %p84
        $region42: #{tpu_custom_call.1} parent=31 // pred_check_branch
          %193 = sbr.rel (%p191) target = $region44
        $region43: #{tpu_custom_call.1} parent=31 // pred_region
          %194 = dma.done [#allocation8], 48
        $region44: #{tpu_custom_call.1} parent=31 // pred_fallthru
          _
        %s195 = sand.u32 %s29, 1
        %s196 = scalar_lea.sflag [#allocation5], %s195
        %s197 = sand.u32 %s29, 1
        %s198 = smul.addr %s197, 4
        %s199 = scalar_lea.vmem [#allocation4], %s198
        %p200 = pneg %p42
        %p201 = pneg %p39
        %p202 = pneg %p63
        %p203 = pneg %p60
        %p204 = pneg %p84
        %p205 = pneg %p81
        %p206 = pneg %p110
        %p207 = pneg %p107
        %s208 = sand.u32 %s97, 1
        %s209 = scalar_lea.sflag [#allocation6], %s208
        %s210 = sand.u32 %s97, 1
        %s211 = smul.addr %s210, 8
        %s212 = scalar_lea.vmem [#allocation10], %s211
        %v214 = vld [vmem:[%s182] sm:$0xf]
        %v215 = vld [vmem:[#allocation7] sm:$0xff]
        %v216 = vld [vmem:[#allocation7 + $0x8] sm:$0xf]
        %v217 = vld [vmem:[#allocation7 + $0xc] sm:$0xff]
        %v218 = vld [vmem:[#allocation7 + $0x14] sm:$0xf]
        %v219 = vld [vmem:[#allocation7 + $0x18] sm:$0xff]
        %v220 = vld [vmem:[#allocation7 + $0x20] sm:$0xf]
        %v221 = vld [vmem:[#allocation7 + $0x24] sm:$0xff]
        %v222 = vld [vmem:[#allocation7 + $0x2c] sm:$0xf]
        %v223 = vld [vmem:[#allocation7 + $0x30] sm:$0xff]
        %v224 = vld [vmem:[#allocation7 + $0x38] sm:$0xf]
        %v225 = vld [vmem:[#allocation7 + $0x3c] sm:$0xff]
        %v226 = vld [vmem:[#allocation7 + $0x44] sm:$0xf]
        %v227 = vld [vmem:[#allocation7 + $0x48] sm:$0xff]
        %v228 = vld [vmem:[#allocation7 + $0x50] sm:$0xf]
        %v229 = vld [vmem:[#allocation7 + $0x54] sm:$0xff]
        %v230 = vld [vmem:[#allocation7 + $0x5c] sm:$0xf]
        %v231 = vld [vmem:[#allocation7 + $0x60] sm:$0xff]
        %v232 = vld [vmem:[#allocation7 + $0x68] sm:$0xf]
        %v233 = vld [vmem:[#allocation7 + $0x6c] sm:$0xff]
        %v234 = vld [vmem:[#allocation7 + $0x74] sm:$0xf]
        %v235 = vld [vmem:[#allocation7 + $0x78] sm:$0xff]
        %v236 = vld [vmem:[#allocation7 + $0x80] sm:$0xf]
        %v237 = vld [vmem:[#allocation7 + $0x84] sm:$0xff]
        %v238 = vld [vmem:[#allocation7 + $0x8c] sm:$0xf]
        %v239 = vld [vmem:[#allocation7 + $0x90] sm:$0xff]
        %v240 = vld [vmem:[#allocation7 + $0x98] sm:$0xf]
        %v241 = vld [vmem:[#allocation7 + $0x9c] sm:$0xff]
        %v242 = vld [vmem:[#allocation7 + $0xa4] sm:$0xf]
        %v243 = vld [vmem:[#allocation7 + $0xa8] sm:$0xff]
        %v244 = vld [vmem:[#allocation7 + $0xb0] sm:$0xf]
        %v245 = vld [vmem:[#allocation7 + $0xb4] sm:$0xff]
        %v246 = vld [vmem:[#allocation7 + $0xbc] sm:$0xf]
        %v247 = vld [vmem:[#allocation9] sm:$0x7]
        %v249 = vlaneseq
        %v250 = vshrl.u32 %v249, 7
        %v251 = vsub.s32 0, %v250
        %v252 = vrot.slane %v247, %v251
        %v253 = vlaneseq
        %v254 = vshrl.u32 %v253, 7
        %v255 = vsub.s32 1, %v254
        %v256 = vrot.slane %v247, %v255
        %v257 = vlaneseq
        %v258 = vshrl.u32 %v257, 7
        %v259 = vsub.s32 2, %v258
        %v260 = vrot.slane %v247, %v259
        %v296 = vunpack.c.l.b16 %v215
        %v297 = vunpack.c.h.b16 %v215
        %v298 = vunpack.c.l.b16 %v216
        %v299 = vunpack.c.l.b16 %v217
        %v300 = vunpack.c.h.b16 %v217
        %v301 = vunpack.c.l.b16 %v218
        %v302 = vunpack.c.l.b16 %v219
        %v303 = vunpack.c.h.b16 %v219
        %v304 = vunpack.c.l.b16 %v220
        %v305 = vunpack.c.l.b16 %v221
        %v306 = vunpack.c.h.b16 %v221
        %v307 = vunpack.c.l.b16 %v222
        %v308 = vunpack.c.l.b16 %v223
        %v309 = vunpack.c.h.b16 %v223
        %v310 = vunpack.c.l.b16 %v224
        %v311 = vunpack.c.l.b16 %v225
        %v312 = vunpack.c.h.b16 %v225
        %v313 = vunpack.c.l.b16 %v226
        %v314 = vunpack.c.l.b16 %v227
        %v315 = vunpack.c.h.b16 %v227
        %v316 = vunpack.c.l.b16 %v228
        %v317 = vunpack.c.l.b16 %v229
        %v318 = vunpack.c.h.b16 %v229
        %v319 = vunpack.c.l.b16 %v230
        %v320 = vunpack.c.l.b16 %v231
        %v321 = vunpack.c.h.b16 %v231
        %v322 = vunpack.c.l.b16 %v232
        %v323 = vunpack.c.l.b16 %v233
        %v324 = vunpack.c.h.b16 %v233
        %v325 = vunpack.c.l.b16 %v234
        %v326 = vunpack.c.l.b16 %v235
        %v327 = vunpack.c.h.b16 %v235
        %v328 = vunpack.c.l.b16 %v236
        %v329 = vunpack.c.l.b16 %v237
        %v330 = vunpack.c.h.b16 %v237
        %v331 = vunpack.c.l.b16 %v238
        %v332 = vunpack.c.l.b16 %v239
        %v333 = vunpack.c.h.b16 %v239
        %v334 = vunpack.c.l.b16 %v240
        %v335 = vunpack.c.l.b16 %v241
        %v336 = vunpack.c.h.b16 %v241
        %v337 = vunpack.c.l.b16 %v242
        %v338 = vunpack.c.l.b16 %v243
        %v339 = vunpack.c.h.b16 %v243
        %v340 = vunpack.c.l.b16 %v244
        %v341 = vunpack.c.l.b16 %v245
        %v342 = vunpack.c.h.b16 %v245
        %v343 = vunpack.c.l.b16 %v246
        %v344 = vpack.c.b16 %v299, %v296
        %v345 = vpack.c.b16 %v300, %v297
        %v346 = vpack.c.b16 %v301, %v298
        %v347 = vpack.c.b16 %v305, %v302
        %v348 = vpack.c.b16 %v306, %v303
        %v349 = vpack.c.b16 %v307, %v304
        %v350 = vpack.c.b16 %v311, %v308
        %v351 = vpack.c.b16 %v312, %v309
        %v352 = vpack.c.b16 %v313, %v310
        %v353 = vpack.c.b16 %v317, %v314
        %v354 = vpack.c.b16 %v318, %v315
        %v355 = vpack.c.b16 %v319, %v316
        %v356 = vpack.c.b16 %v323, %v320
        %v357 = vpack.c.b16 %v324, %v321
        %v358 = vpack.c.b16 %v325, %v322
        %v359 = vpack.c.b16 %v329, %v326
        %v360 = vpack.c.b16 %v330, %v327
        %v361 = vpack.c.b16 %v331, %v328
        %v362 = vpack.c.b16 %v335, %v332
        %v363 = vpack.c.b16 %v336, %v333
        %v364 = vpack.c.b16 %v337, %v334
        %v365 = vpack.c.b16 %v341, %v338
        %v366 = vpack.c.b16 %v342, %v339
        %v367 = vpack.c.b16 %v343, %v340
        %392 = vmatprep.subr.bf16.mxu0 %v345
        %393 = vmatpush1.bf16.msra.mxu0 %v344
        %394 = vmatprep.subr.bf16.mxu0 %v348
        %395 = vmatpush1.bf16.msra.mxu0 %v347
        %396 = vmatprep.subr.bf16.mxu0 %v351
        %397 = vmatpush1.bf16.msra.mxu0 %v350
        %398 = vmatprep.subr.bf16.mxu0 %v354
        %399 = vmatpush1.bf16.msra.mxu0 %v353
        %400 = vmatprep.subr.bf16.mxu0 %v357
        %401 = vmatpush1.bf16.msra.mxu0 %v356
        %402 = vmatprep.subr.bf16.mxu0 %v360
        %403 = vmatpush1.bf16.msra.mxu0 %v359
        %404 = vmatprep.subr.bf16.mxu0 %v363
        %405 = vmatpush1.bf16.msra.mxu0 %v362
        %406 = vmatprep.subr.bf16.mxu0 %v366
        %407 = vmatpush1.bf16.msra.mxu0 %v365
        %408 = vmatprep.subr.bf16.mxu0 0
        %409 = vmatpush1.bf16.msra.mxu0 0
        %410 = vmatprep.subr.bf16.mxu0 0
        %411 = vmatpush1.bf16.msra.mxu0 0
        %412 = vmatprep.subr.bf16.mxu0 0
        %413 = vmatpush1.bf16.msra.mxu0 0
        %414 = vmatprep.subr.bf16.mxu0 0
        %415 = vmatpush1.bf16.msra.mxu0 0
        %416 = vmatprep.subr.bf16.mxu0 0
        %417 = vmatpush1.bf16.msra.mxu0 0
        %418 = vmatprep.subr.bf16.mxu0 0
        %419 = vmatpush1.bf16.msra.mxu0 0
        %420 = vmatprep.subr.bf16.mxu0 0
        %421 = vmatpush1.bf16.msra.mxu0 0
        %422 = vmatprep.subr.bf16.mxu0 0
        %423 = vmatpush1.bf16.msra.mxu0 0
        %424 = vmatprep.mubr.bf16.mxu0 0
        %425 = vmatmul.mubr.bf16.gmra.mrb[0].mxu0 %v214
        %v426 = vpop.f32.mrb[0].mxu0
        %v427 = vadd.f32 %v252, %v426
        %v428 = vpop.f32.mrb[0].mxu0
        %v429 = vadd.f32 %v256, %v428
        %v430 = vpop.f32.mrb[0].mxu0
        %v431 = vpop.f32.mrb[0].mxu0
        %432 = vdwg.mxu0
        %433 = vmatprep.subr.bf16.mxu0 0
        %434 = vmatpush1.bf16.msra.mxu0 %v346
        %435 = vmatprep.subr.bf16.mxu0 0
        %436 = vmatpush1.bf16.msra.mxu0 %v349
        %437 = vmatprep.subr.bf16.mxu0 0
        %438 = vmatpush1.bf16.msra.mxu0 %v352
        %439 = vmatprep.subr.bf16.mxu0 0
        %440 = vmatpush1.bf16.msra.mxu0 %v355
        %441 = vmatprep.subr.bf16.mxu0 0
        %442 = vmatpush1.bf16.msra.mxu0 %v358
        %443 = vmatprep.subr.bf16.mxu0 0
        %444 = vmatpush1.bf16.msra.mxu0 %v361
        %445 = vmatprep.subr.bf16.mxu0 0
        %446 = vmatpush1.bf16.msra.mxu0 %v364
        %447 = vmatprep.subr.bf16.mxu0 0
        %448 = vmatpush1.bf16.msra.mxu0 %v367
        %449 = vmatprep.subr.bf16.mxu0 0
        %450 = vmatpush1.bf16.msra.mxu0 0
        %451 = vmatprep.subr.bf16.mxu0 0
        %452 = vmatpush1.bf16.msra.mxu0 0
        %453 = vmatprep.subr.bf16.mxu0 0
        %454 = vmatpush1.bf16.msra.mxu0 0
        %455 = vmatprep.subr.bf16.mxu0 0
        %456 = vmatpush1.bf16.msra.mxu0 0
        %457 = vmatprep.subr.bf16.mxu0 0
        %458 = vmatpush1.bf16.msra.mxu0 0
        %459 = vmatprep.subr.bf16.mxu0 0
        %460 = vmatpush1.bf16.msra.mxu0 0
        %461 = vmatprep.subr.bf16.mxu0 0
        %462 = vmatpush1.bf16.msra.mxu0 0
        %463 = vmatprep.subr.bf16.mxu0 0
        %464 = vmatpush1.bf16.msra.mxu0 0
        %465 = vmatprep.mubr.bf16.mxu0 0
        %466 = vmatmul.mubr.bf16.gmra.mrb[0].mxu0 %v214
        %v467 = vpop.f32.mrb[0].mxu0
        %v468 = vadd.f32 %v260, %v467
        %v469 = vpop.f32.mrb[0].mxu0
        %v470 = vpop.f32.mrb[0].mxu0
        %v471 = vpop.f32.mrb[0].mxu0
        %472 = vdwg.mxu0
        %v473 = vpack.c.bf16 %v427, %v427
        %v474 = vpack.c.bf16 %v429, %v429
        %v475 = vpack.c.bf16 %v468, %v468
        %476 = vst [vmem:[#allocation2] sm:$0xf] %v473
        %s477 = scalar_lea.vmem [#allocation2], 4
        %478 = vst [vmem:[%s477] sm:$0xf] %v474
        %s479 = scalar_lea.vmem [#allocation2], 8
        %480 = vst [vmem:[%s479] sm:$0xf] %v475
        %v481 = vld [vmem:[#allocation2] sm:$0xf]
        %482 = vst [vmem:[#allocation3] sm:$0xff] 0.0
        %s483 = sadd.s32 0, 1
        %s484 = smul.addr %s483, 4
        %s485 = scalar_lea.vmem [#allocation2], %s484
        %v486 = vld [vmem:[%s485] sm:$0xf]
        %s487 = sadd.s32 0, 2
        %s488 = smul.addr %s487, 4
        %s489 = scalar_lea.vmem [#allocation2], %s488
        %v490 = vld [vmem:[%s489] sm:$0xf]
        %491 = vmatprep.subr.bf16.mxu0 0
        %492 = vmatpush1.bf16.xpose.msra.mxu0 %v486
        %493 = vmatprep.subr.bf16.mxu0 0
        %494 = vmatpush1.bf16.xpose.msra.mxu0 0
        %495 = vmatprep.subr.bf16.mxu0 0
        %496 = vmatpush1.bf16.xpose.msra.mxu0 0
        %497 = vmatprep.subr.bf16.mxu0 0
        %498 = vmatpush1.bf16.xpose.msra.mxu0 0
        %499 = vmatprep.subr.bf16.mxu0 0
        %500 = vmatpush1.bf16.xpose.msra.mxu0 0
        %501 = vmatprep.subr.bf16.mxu0 0
        %502 = vmatpush1.bf16.xpose.msra.mxu0 0
        %503 = vmatprep.subr.bf16.mxu0 0
        %504 = vmatpush1.bf16.xpose.msra.mxu0 0
        %505 = vmatprep.subr.bf16.mxu0 0
        %506 = vmatpush1.bf16.xpose.msra.mxu0 0
        %507 = vmatprep.subr.bf16.mxu0 0
        %508 = vmatpush1.bf16.xpose.msra.mxu0 0
        %509 = vmatprep.subr.bf16.mxu0 0
        %510 = vmatpush1.bf16.xpose.msra.mxu0 0
        %511 = vmatprep.subr.bf16.mxu0 0
        %512 = vmatpush1.bf16.xpose.msra.mxu0 0
        %513 = vmatprep.subr.bf16.mxu0 0
        %514 = vmatpush1.bf16.xpose.msra.mxu0 0
        %515 = vmatprep.subr.bf16.mxu0 0
        %516 = vmatpush1.bf16.xpose.msra.mxu0 0
        %517 = vmatprep.subr.bf16.mxu0 0
        %518 = vmatpush1.bf16.xpose.msra.mxu0 0
        %519 = vmatprep.subr.bf16.mxu0 0
        %520 = vmatpush1.bf16.xpose.msra.mxu0 0
        %521 = vmatprep.subr.bf16.mxu0 0
        %522 = vmatpush1.bf16.xpose.msra.mxu0 0
        %523 = vmatprep.mubr.bf16.mxu0 0
        %524 = vmatmul.mubr.bf16.gmra.mrb[0].mxu0 %v481
        %v525 = vpop.f32.mrb[0].mxu0
        %v526 = vadd.f32 0.0, %v525
        %v527 = vpop.f32.mrb[0].mxu0
        %v528 = vpop.f32.mrb[0].mxu0
        %v529 = vpop.f32.mrb[0].mxu0
        %530 = vdwg.mxu0
        %vm531 = vcmask 64512
        %v532 = vsel %vm531, %v526, -inf
        %v533 = vrot.slane %v532, 4
        %v534 = vmax.f32 %v532, %v533
        %v535 = vrot.slane %v534, 2
        %v536 = vmax.f32 %v534, %v535
        %v537 = vrot.slane %v536, 1
        %v538 = vmax.f32 %v536, %v537
        %v539 = vsub.f32 %v526, %v538
        %v540 = vmul.f32 %v539, 1.442695
        %v541 = vpow.pop %v540
        %v542 = vsel %vm531, %v541, 0.0
        %v543 = vrot.slane %v542, 4
        %v544 = vadd.f32 %v542, %v543
        %v545 = vrot.slane %v544, 2
        %v546 = vadd.f32 %v544, %v545
        %v547 = vrot.slane %v546, 1
        %v548 = vadd.f32 %v546, %v547
        %v549 = vrcp.pop %v548
        %v550 = vmul.f32 %v541, %v549
        %v551 = vpack.c.bf16 %v550, %v550
        %v552 = vld [vmem:[#allocation3] sm:$0xff]
        %v554 = vsel %vm531, %v551, 0
        %vm556 = vcmask 1043456
        %v558 = vsel %vm556, %v490, 0
        %560 = vmatprep.subr.bf16.mxu0 0
        %561 = vmatpush1.bf16.msra.mxu0 %v558
        %562 = vmatprep.subr.bf16.mxu0 0
        %563 = vmatpush1.bf16.msra.mxu0 0
        %564 = vmatprep.subr.bf16.mxu0 0
        %565 = vmatpush1.bf16.msra.mxu0 0
        %566 = vmatprep.subr.bf16.mxu0 0
        %567 = vmatpush1.bf16.msra.mxu0 0
        %568 = vmatprep.subr.bf16.mxu0 0
        %569 = vmatpush1.bf16.msra.mxu0 0
        %570 = vmatprep.subr.bf16.mxu0 0
        %571 = vmatpush1.bf16.msra.mxu0 0
        %572 = vmatprep.subr.bf16.mxu0 0
        %573 = vmatpush1.bf16.msra.mxu0 0
        %574 = vmatprep.subr.bf16.mxu0 0
        %575 = vmatpush1.bf16.msra.mxu0 0
        %576 = vmatprep.subr.bf16.mxu0 0
        %577 = vmatpush1.bf16.msra.mxu0 0
        %578 = vmatprep.subr.bf16.mxu0 0
        %579 = vmatpush1.bf16.msra.mxu0 0
        %580 = vmatprep.subr.bf16.mxu0 0
        %581 = vmatpush1.bf16.msra.mxu0 0
        %582 = vmatprep.subr.bf16.mxu0 0
        %583 = vmatpush1.bf16.msra.mxu0 0
        %584 = vmatprep.subr.bf16.mxu0 0
        %585 = vmatpush1.bf16.msra.mxu0 0
        %586 = vmatprep.subr.bf16.mxu0 0
        %587 = vmatpush1.bf16.msra.mxu0 0
        %588 = vmatprep.subr.bf16.mxu0 0
        %589 = vmatpush1.bf16.msra.mxu0 0
        %590 = vmatprep.subr.bf16.mxu0 0
        %591 = vmatpush1.bf16.msra.mxu0 0
        %592 = vmatprep.mubr.bf16.mxu0 0
        %593 = vmatmul.mubr.bf16.gmra.mrb[0].mxu0 %v554
        %v594 = vpop.f32.mrb[0].mxu0
        %v595 = vadd.f32 0.0, %v594
        %v596 = vpop.f32.mrb[0].mxu0
        %v597 = vpop.f32.mrb[0].mxu0
        %v598 = vpop.f32.mrb[0].mxu0
        %599 = vdwg.mxu0
        %v600 = vadd.f32 %v552, %v595
        %601 = vst [vmem:[#allocation3] sm:$0xff] %v600
        %v602 = vld [vmem:[#allocation3] sm:$0xff]
        %603 = vst [vmem:[%s212] sm:$0xff] %v602
        %s604 = sand.u32 %s97, 1
        %s605 = scalar_lea.sflag [#allocation6], %s604
        %s606 = sand.u32 %s97, 1
        %s607 = smul.addr %s606, 8
        %s608 = scalar_lea.vmem [#allocation10], %s607
        // Predicated region
        $region45: #{tpu_custom_call.1} parent=31 // pred_check
          %p609 = pneg %p107
        $region46: #{tpu_custom_call.1} parent=31 // pred_check_branch
          %611 = sbr.rel (%p609) target = $region48
        $region47: #{tpu_custom_call.1} parent=31 // pred_region
          %s613 = ssub.s32 128, 128
          %614 = vsyncadd %s605, %s613
          %s615 = smul.addr %s21, 128
          %s616 = scalar_lea.hbm %s3, %s615
          %s618 = sshll.u32 %s608, 4
          %s619 = int_to_ptr.vmem [resolvable:$true] %s618
          %621 = dma.vmem_to_hbm [thread:$0]  %s619, 128, %s616, %s605
        $region48: #{tpu_custom_call.1} parent=31 // pred_fallthru
          _
      $region32: #{tpu_custom_call.1} parent=5 // pred_fallthru
        _
      %p622 = scmp.le.s32.totalorder 2, %s16
      // Predicated region
      $region49: #{tpu_custom_call.1} parent=5 // pred_check
        %p623 = pneg %p622
      $region50: #{tpu_custom_call.1} parent=5 // pred_check_branch
        %625 = sbr.rel (%p623) target = $region52
      $region51: #{tpu_custom_call.1} parent=5 // pred_region
        %s626 = ssub.s32 %s16, 2
        // Predicated region
        $region53: #{tpu_custom_call.1} parent=51 // pred_check
          %p627 = pneg %p113
        $region54: #{tpu_custom_call.1} parent=51 // pred_check_branch
          %629 = sbr.rel (%p627) target = $region56
        $region55: #{tpu_custom_call.1} parent=51 // pred_region
          %s630 = sand.u32 %s98, 1
          %s631 = scalar_lea.sflag [#allocation6], %s630
          %s632 = sand.u32 %s98, 1
          %s633 = smul.addr %s632, 8
          %s634 = scalar_lea.vmem [#allocation10], %s633
          %635 = dma.done %s631, 128
        $region56: #{tpu_custom_call.1} parent=51 // pred_fallthru
          _
      $region52: #{tpu_custom_call.1} parent=5 // pred_fallthru
        _
    $region6: #{tpu_custom_call.1} parent=1 // loop_footer
      %s20 = sadd.s32 1, %s16
    $region7: #{tpu_custom_call.1} parent=1 // loop_footer_branch
      %15 = sbr.rel target = $region3
    $region8: #{tpu_custom_call.1} parent=1 // loop_exit
      _
    %636 = vsyncpa [#allocation5], 1
    %s637 = scalar_lea.sflag [#allocation5], 1
    %638 = vsyncpa %s637, 1
    %639 = vsyncpa [#allocation8], 1
    %640 = vsyncpa [#allocation6], 1
    %s641 = scalar_lea.sflag [#allocation6], 1
    %642 = vsyncpa %s641, 1

</llo_original>
